<compile_context>
chip_gen: v7x
topology: tpu7x:2x2x1
jax: 0.10.0
libtpu: 0.0.40
codegen_flags: <defaults>
</compile_context>

<pallas_src>
import jax
import jax.numpy as jnp
import numpy as np
from jax.experimental import pallas as pl
from jax.experimental.pallas import tpu as pltpu

BN_EPS = 1e-5
TILE_ROWS = 512                      # Npix rows per grid step (multiple of 8)
VMEM_LIMIT_BYTES = 48 * 1024 * 1024  # fits v7x's 64 MiB, raises v5e/v6e scope


def _round_up(x, m):
    return (x + m - 1) // m * m


def _tiling(npix):
    """Row-tile size (multiple of 8) and padded row count for a given Npix."""
    tr = min(TILE_ROWS, _round_up(npix, 8))
    return tr, _round_up(npix, tr)


# ----------------------------- Pallas kernels ------------------------------ #
def _matmul_stats_kernel(x_ref, w_ref, y_ref, stats_ref):
    """Conv-as-matmul tile on the MXU + per-tile BN partial sums.

    x_ref: (tr, Kpad) bf16, w_ref: (Kpad, Cpad) bf16
    y_ref: (tr, Cpad) bf16/f32,  stats_ref: (1, 2, Cpad) f32 = [sum, sum_sq]
    Stats are taken from the f32 accumulator (before any downcast), so BN
    statistics are independent of the storage dtype of y.
    """
    y = jnp.dot(x_ref[...], w_ref[...], preferred_element_type=jnp.float32)
    y_ref[...] = y.astype(y_ref.dtype)
    s1 = jnp.sum(y, axis=0, keepdims=True)        # (1, Cpad)
    s2 = jnp.sum(y * y, axis=0, keepdims=True)    # (1, Cpad)
    stats_ref[...] = jnp.concatenate([s1, s2], axis=0)[None, :, :]


def _make_affine_kernel(has_residual, apply_relu):
    """Fused BN-normalize epilogue: y*scale+shift (+ res*scale_s+shift_s) (+ReLU)."""

    def kernel(*refs):
        if has_residual:
            y_ref, res_ref, sc_ref, sh_ref, scs_ref, shs_ref, o_ref = refs
        else:
            y_ref, sc_ref, sh_ref, o_ref = refs
        out = y_ref[...].astype(jnp.float32) * sc_ref[...] + sh_ref[...]
        if has_residual:
            out = out + (res_ref[...].astype(jnp.float32) * scs_ref[...]
                         + shs_ref[...])
        if apply_relu:
            out = jnp.maximum(out, 0.0)
        o_ref[...] = out.astype(o_ref.dtype)

    return kernel


# ------------------------------ Pallas wrappers ----------------------------- #
def conv_matmul_stats(xcol, w_flat, cpad, npix_pad, tile_rows,
                      out_dtype=jnp.bfloat16):
    """(Npix, K) @ (K, Cout) tiled over Npix; returns (y_padded, per-tile stats)."""
    npix, k = xcol.shape
    cout = w_flat.shape[1]
    kpad = _round_up(k, 128)

    xcol_p = jnp.pad(xcol.astype(jnp.bfloat16),
                     ((0, npix_pad - npix), (0, kpad - k)))
    w_p = jnp.pad(w_flat.astype(jnp.bfloat16),
                  ((0, kpad - k), (0, cpad - cout)))
    grid = npix_pad // tile_rows

    y, stats = pl.pallas_call(
        _matmul_stats_kernel,
        out_shape=(jax.ShapeDtypeStruct((npix_pad, cpad), out_dtype),
                   jax.ShapeDtypeStruct((grid, 2, cpad), jnp.float32)),
        grid=(grid,),
        in_specs=[pl.BlockSpec((tile_rows, kpad), lambda i: (i, 0)),
                  pl.BlockSpec((kpad, cpad), lambda i: (0, 0))],
        out_specs=(pl.BlockSpec((tile_rows, cpad), lambda i: (i, 0)),
                   pl.BlockSpec((1, 2, cpad), lambda i: (i, 0, 0))),
        compiler_params=pltpu.CompilerParams(
            dimension_semantics=("parallel",),
            vmem_limit_bytes=VMEM_LIMIT_BYTES),
    )(xcol_p, w_p)
    return y, stats


def affine_epilogue(y, scale, shift, *, residual=None, res_scale=None,
                    res_shift=None, relu=True, out_dtype=jnp.float32,
                    tile_rows=TILE_ROWS):
    """Tiled normalize (+residual) (+ReLU) over the padded (Npix_pad, Cpad) slab."""
    npix_pad, cpad = y.shape
    grid = npix_pad // tile_rows
    row_spec = pl.BlockSpec((tile_rows, cpad), lambda i: (i, 0))
    vec_spec = pl.BlockSpec((1, cpad), lambda i: (0, 0))

    if residual is None:
        inputs = [y, scale, shift]
        in_specs = [row_spec, vec_spec, vec_spec]
    else:
        inputs = [y, residual, scale, shift, res_scale, res_shift]
        in_specs = [row_spec, row_spec, vec_spec, vec_spec, vec_spec, vec_spec]

    return pl.pallas_call(
        _make_affine_kernel(residual is not None, relu),
        out_shape=jax.ShapeDtypeStruct((npix_pad, cpad), out_dtype),
        grid=(grid,),
        in_specs=in_specs,
        out_specs=row_spec,
        compiler_params=pltpu.CompilerParams(
            dimension_semantics=("parallel",),
            vmem_limit_bytes=VMEM_LIMIT_BYTES),
    )(*inputs)


def finalize_bn(stats, gamma, beta, npix, cpad, eps=BN_EPS):
    """Reduce per-tile (sum, sum_sq) partials globally -> per-channel scale/shift."""
    s = jnp.sum(stats, axis=0)                      # (2, Cpad) f32
    mean = s[0] / npix
    var = jnp.maximum(s[1] / npix - mean * mean, 0.0)   # biased var (train mode)
    inv = jax.lax.rsqrt(var + eps)
    g = jnp.pad(gamma.astype(jnp.float32), (0, cpad - gamma.shape[0]))
    b = jnp.pad(beta.astype(jnp.float32), (0, cpad - beta.shape[0]))
    scale = g * inv
    shift = b - mean * scale
    return scale.reshape(1, cpad), shift.reshape(1, cpad)


# --------------------------------- JAX glue --------------------------------- #
def _im2col(x_nhwc, ksize, stride, pad):
    """Extract conv patches. Returns ((N*Ho*Wo, ksize*ksize*C), Ho, Wo)."""
    n, h, w, c = x_nhwc.shape
    xp = jnp.pad(x_nhwc, ((0, 0), (pad, pad), (pad, pad), (0, 0)))
    ho = (h + 2 * pad - ksize) // stride + 1
    wo = (w + 2 * pad - ksize) // stride + 1
    cols = []
    for kh in range(ksize):
        for kw in range(ksize):
            cols.append(xp[:, kh:kh + stride * ho:stride,
                           kw:kw + stride * wo:stride, :])  # (N, Ho, Wo, C)
    patches = jnp.concatenate(cols, axis=-1)   # order (kh, kw, c)
    return patches.reshape(n * ho * wo, ksize * ksize * c), ho, wo


def init_params(key, cin, cout, stride):
    """Deterministic synthetic parameters (shapes match the PyTorch module)."""
    k1, k2, k3 = jax.random.split(key, 3)
    p = {
        # conv weights stored (kh, kw, cin, cout) so .reshape(k*k*cin, cout)
        # matches the im2col column ordering.
        "w1": 0.1 * jax.random.normal(k1, (3, 3, cin, cout), jnp.float32),
        "g1": jnp.ones((cout,), jnp.float32),
        "b1": jnp.zeros((cout,), jnp.float32),
        "w2": 0.1 * jax.random.normal(k2, (3, 3, cout, cout), jnp.float32),
        "g2": jnp.ones((cout,), jnp.float32),
        "b2": jnp.zeros((cout,), jnp.float32),
    }
    if stride != 1 or cin != cout:
        p["ws"] = 0.1 * jax.random.normal(k3, (cin, cout), jnp.float32)  # 1x1 conv
        p["gs"] = jnp.ones((cout,), jnp.float32)
        p["bs"] = jnp.zeros((cout,), jnp.float32)
    return p


def basic_block_forward(x_nchw, params, stride):
    """BasicBlock forward. Input/output: NCHW float32 (train-mode BN)."""
    x = jnp.transpose(x_nchw, (0, 2, 3, 1)).astype(jnp.float32)   # NHWC
    n, h, w, cin = x.shape
    cout = params["w1"].shape[-1]
    cpad = _round_up(cout, 128)

    # ---- conv1 (3x3, stride, pad=1) + bn1 + relu ----
    # TODO(synk): replace host-side im2col with an in-kernel halo-tiled
    # 9-accumulating-matmul conv to remove the 9x HBM patch-matrix inflation.
    xcol1, ho, wo = _im2col(x, 3, stride, 1)
    npix = n * ho * wo
    tr, npix_pad = _tiling(npix)

    w1f = params["w1"].reshape(9 * cin, cout)
    y1, st1 = conv_matmul_stats(xcol1, w1f, cpad, npix_pad, tr)      # bf16 slab
    sc1, sh1 = finalize_bn(st1, params["g1"], params["b1"], npix, cpad)
    h1 = affine_epilogue(y1, sc1, sh1, relu=True, out_dtype=jnp.bfloat16,
                         tile_rows=tr)                       # (npix_pad, cpad) bf16
    h1_img = h1[:npix, :cout].reshape(n, ho, wo, cout)       # bf16 inter-conv act

    # ---- shortcut branch (BN folded into the final epilogue as scale/shift) ----
    if "ws" in params:
        xs = x[:, ::stride, ::stride, :].reshape(npix, cin)  # 1x1 stride-s conv
        ys, sts = conv_matmul_stats(xs, params["ws"], cpad, npix_pad, tr)
        scs, shs = finalize_bn(sts, params["gs"], params["bs"], npix, cpad)
        res = ys                                             # bf16 slab
    else:
        res = jnp.pad(x.reshape(npix, cin),
                      ((0, npix_pad - npix), (0, cpad - cin))).astype(jnp.bfloat16)
        scs = jnp.ones((1, cpad), jnp.float32)
        shs = jnp.zeros((1, cpad), jnp.float32)

    # ---- conv2 (3x3, stride=1, pad=1) + bn2 + residual add + relu ----
    xcol2, _, _ = _im2col(h1_img, 3, 1, 1)
    w2f = params["w2"].reshape(9 * cout, cout)
    y2, st2 = conv_matmul_stats(xcol2, w2f, cpad, npix_pad, tr)      # bf16 slab
    sc2, sh2 = finalize_bn(st2, params["g2"], params["b2"], npix, cpad)
    out = affine_epilogue(y2, sc2, sh2, residual=res, res_scale=scs,
                          res_shift=shs, relu=True, out_dtype=jnp.float32,
                          tile_rows=tr)

    out = out[:npix, :cout].reshape(n, ho, wo, cout)
    return jnp.transpose(out, (0, 3, 1, 2))                  # back to NCHW


# --------------------------- pure-JAX reference ----------------------------- #
def basic_block_ref(x_nchw, p, stride):
    def conv(x, w_khwcio, s, pad):
        w = jnp.transpose(w_khwcio, (3, 2, 0, 1))  # OIHW
        return jax.lax.conv_general_dilated(
            x, w, (s, s), [(pad, pad), (pad, pad)],
            dimension_numbers=("NCHW", "OIHW", "NCHW"),
            precision=jax.lax.Precision.HIGHEST)

    def bn(y, g, b):
        m = jnp.mean(y, axis=(0, 2, 3), keepdims=True)
        v = jnp.mean((y - m) ** 2, axis=(0, 2, 3), keepdims=True)
        return ((y - m) * jax.lax.rsqrt(v + BN_EPS) * g.reshape(1, -1, 1, 1)
                + b.reshape(1, -1, 1, 1))

    out = jax.nn.relu(bn(conv(x_nchw, p["w1"], stride, 1), p["g1"], p["b1"]))
    out = bn(conv(out, p["w2"], 1, 1), p["g2"], p["b2"])
    if "ws" in p:
        ws = p["ws"].reshape(1, 1, *p["ws"].shape)  # (1,1,Cin,Cout)
        sc = bn(conv(x_nchw, ws, stride, 0), p["gs"], p["bs"])
    else:
        sc = x_nchw
    return jax.nn.relu(out + sc)


# ---------------------------------- main ------------------------------------ #
if __name__ == "__main__":
    key = jax.random.PRNGKey(0)
    kx, kp1, kp2 = jax.random.split(key, 3)
    x = jax.random.normal(kx, (2, 4, 16, 16), jnp.float32)

    # Projection block: in=4, out=8, stride=2 (exercises the conv shortcut).
    p_proj = init_params(kp1, 4, 8, 2)
    out_proj = jax.block_until_ready(basic_block_forward(x, p_proj, stride=2))
    np.testing.assert_allclose(out_proj, basic_block_ref(x, p_proj, 2),
                               rtol=5e-2, atol=5e-2)
    assert out_proj.shape == (2, 8, 8, 8)

    # Identity block: in=4, out=4, stride=1 (identity shortcut).
    p_id = init_params(kp2, 4, 4, 1)
    out_id = jax.block_until_ready(basic_block_forward(x, p_id, stride=1))
    np.testing.assert_allclose(out_id, basic_block_ref(x, p_id, 1),
                               rtol=5e-2, atol=5e-2)
    assert out_id.shape == (2, 4, 16, 16)

    print("KERNEL_OK")
</pallas_src>

<mosaic_0001>
module attributes {stable_mosaic.version = 11 : i64} {
  func.func @_matmul_stats_kernel(%arg0: i32, %arg1: memref<128x128xbf16, #tpu.memory_space<vmem>>, %arg2: memref<128x128xbf16, #tpu.memory_space<vmem>>, %arg3: memref<128x128xbf16, #tpu.memory_space<vmem>>, %arg4: memref<1x2x128xf32, #tpu.memory_space<vmem>>) attributes {dimension_semantics = [#tpu.dimension_semantics<parallel>], iteration_bounds = array<i64: 1>, scalar_prefetch = 0 : i64, scratch_operands = 0 : i64, tpu.core_type = #tpu.core_type<tc>, window_params = [{transform_indices = @transform_0, window_bounds = array<i64: 128, 128>}, {pipeline_mode = #tpu.pipeline_mode<synchronous>, transform_indices = @transform_1, window_bounds = array<i64: 128, 128>}, {transform_indices = @transform_2, window_bounds = array<i64: 128, 128>}, {transform_indices = @transform_3, window_bounds = array<i64: 1, 2, 128>}]} {
    %c0 = arith.constant 0 : index
    %c0_0 = arith.constant 0 : index
    %0 = vector.load %arg1[%c0, %c0_0] : memref<128x128xbf16, #tpu.memory_space<vmem>>, vector<128x128xbf16>
    %c0_1 = arith.constant 0 : index
    %c0_2 = arith.constant 0 : index
    %1 = vector.load %arg2[%c0_1, %c0_2] : memref<128x128xbf16, #tpu.memory_space<vmem>>, vector<128x128xbf16>
    %cst = arith.constant dense<0.000000e+00> : vector<128x128xf32>
    %2 = tpu.matmul %0, %1, %cst {dimension_numbers = #tpu.dot_dimension_numbers<[1], [0], [0], [1], [0, 0, 1, 1], [], []>} : vector<128x128xbf16>, vector<128x128xbf16>, vector<128x128xf32> -> vector<128x128xf32>
    %3 = arith.truncf %2 : vector<128x128xf32> to vector<128x128xbf16>
    %c0_3 = arith.constant 0 : index
    %c0_4 = arith.constant 0 : index
    %4 = vector.load %arg3[%c0_3, %c0_4] : memref<128x128xbf16, #tpu.memory_space<vmem>>, vector<128x128xbf16>
    tpu.vector_store %arg3[%c0_3, %c0_4], %3 {strides = array<i32>} : memref<128x128xbf16, #tpu.memory_space<vmem>>, vector<128x128xbf16>,
    %cst_5 = arith.constant dense<0.000000e+00> : vector<128xf32>
    %5 = vector.multi_reduction <add>, %2, %cst_5 [0] : vector<128x128xf32> to vector<128xf32>
    %6 = vector.shape_cast %5 : vector<128xf32> to vector<1x128xf32>
    %7 = arith.mulf %2, %2 : vector<128x128xf32>
    %cst_6 = arith.constant dense<0.000000e+00> : vector<128xf32>
    %8 = vector.multi_reduction <add>, %7, %cst_6 [0] : vector<128x128xf32> to vector<128xf32>
    %9 = vector.shape_cast %8 : vector<128xf32> to vector<1x128xf32>
    %10 = tpu.concatenate %6, %9 in 0 : vector<1x128xf32>, vector<1x128xf32> -> vector<2x128xf32>
    %11 = vector.shape_cast %10 : vector<2x128xf32> to vector<1x2x128xf32>
    %c0_7 = arith.constant 0 : index
    %c0_8 = arith.constant 0 : index
    %c0_9 = arith.constant 0 : index
    %12 = vector.load %arg4[%c0_7, %c0_8, %c0_9] : memref<1x2x128xf32, #tpu.memory_space<vmem>>, vector<1x2x128xf32>
    tpu.vector_store %arg4[%c0_7, %c0_8, %c0_9], %11 {strides = array<i32>} : memref<1x2x128xf32, #tpu.memory_space<vmem>>, vector<1x2x128xf32>,
    return
  }
  func.func @transform_0(%arg0: i32) -> (i32, i32) {
    %c0_i32 = arith.constant 0 : i32
    %c0_i32_0 = arith.constant 0 : i32
    return %arg0, %c0_i32 : i32, i32
  }
  func.func @transform_1(%arg0: i32) -> (i32, i32) {
    %c0_i32 = arith.constant 0 : i32
    %c0_i32_0 = arith.constant 0 : i32
    %c0_i32_1 = arith.constant 0 : i32
    return %c0_i32, %c0_i32_0 : i32, i32
  }
  func.func @transform_2(%arg0: i32) -> (i32, i32) {
    %c0_i32 = arith.constant 0 : i32
    %c0_i32_0 = arith.constant 0 : i32
    return %arg0, %c0_i32 : i32, i32
  }
  func.func @transform_3(%arg0: i32) -> (i32, i32, i32) {
    %c0_i32 = arith.constant 0 : i32
    %c0_i32_0 = arith.constant 0 : i32
    %c0_i32_1 = arith.constant 0 : i32
    return %arg0, %c0_i32, %c0_i32_0 : i32, i32, i32
  }
}

</mosaic_0001>

<llo_original>
// kernel: tpu_custom_call.1
$region0: #{tpu_custom_call.1}
  #allocation0 [shape = 'u32[]', space=smem, size = 0x4, offset = 0x4, fixed_abs, tag = 'smem constant byte address 0x4 - core index']
  #allocation1 [shape = 'u32[144,128]{1,0:T(1,128)}', space=vmem, size = 0x12000, scoped, tag = 'internal scratch']
  %s0 = inlined_call_operand.hbm [shape: bf16[128,128], index: 0, kind: input, shape index: {}]
  %s1 = inlined_call_operand.hbm [shape: bf16[128,128], index: 1, kind: input, shape index: {}]
  %s2 = inlined_call_operand.hbm [shape: bf16[128,128], index: 2, kind: output, shape index: {0}]
  %s3 = inlined_call_operand.hbm [shape: f32[1,2,128], index: 3, kind: output, shape index: {1}]
  %4 = xla_tuple %s2, %s3
  %s5 = sld [smem:[#allocation0]]
  $region34: #{tpu_custom_call.1} parent=0
    _
  %s7 = ssub.s32 1, %s5
  %s8 = scalar_select 0, %s7, %s5
  $region1: #{tpu_custom_call.1} parent=0
    #allocation2 [shape = 'u8[32768]{0}', space=vmem, size = 0x8000, scoped, tag = 'input window, operand 0, single buffered']
    #allocation3 [shape = 's32[1]{0}', space=sflag, size = 0x4, scoped, tag = 'scoped memory for tpu_custom_call.1']
    #allocation4 [shape = 's32[1]{0}', space=sflag, size = 0x4, scoped, tag = 'scoped memory for tpu_custom_call.1']
    #allocation5 [shape = 'u8[32768]{0}', space=vmem, size = 0x8000, scoped, tag = 'input window, operand 1, single buffered']
    #allocation6 [shape = 's32[1]{0}', space=sflag, size = 0x4, scoped, tag = 'scoped memory for tpu_custom_call.1']
    #allocation7 [shape = 'u8[32768]{0}', space=vmem, size = 0x8000, scoped, tag = 'output window, operand 0, single buffered']
    #allocation8 [shape = 'u8[1024]{0}', space=vmem, size = 0x400, scoped, tag = 'output window, operand 1, single buffered']
    #allocation9 [shape = 's32[1]{0}', space=sflag, size = 0x4, scoped, tag = 'scoped memory for tpu_custom_call.1']
    %9 = vsyncpa [#allocation3], 0
    %10 = vsyncpa [#allocation6], 0
    %11 = vsyncpa [#allocation4], 0
    %12 = vsyncpa [#allocation9], 0
    // Predicated region
    $region2: #{tpu_custom_call.1} parent=1 // pred_check
      _
    $region3: #{tpu_custom_call.1} parent=1 // pred_check_branch
      %14 = sbr.rel (0) target = $region5
    $region4: #{tpu_custom_call.1} parent=1 // pred_region
      %s16 = ssub.s32 1024, 1024
      %17 = vsyncadd [#allocation3], %s16
      %s18 = sshll.u32 [#allocation2], 4
      %s19 = int_to_ptr.vmem [resolvable:$true] %s18
      %24 = dma.hbm_to_vmem [thread:$0]  %s0, 1024, %s19, [#allocation3], 64, 64, 4
    $region5: #{tpu_custom_call.1} parent=1 // pred_fallthru
      _
    // Predicated region
    $region6: #{tpu_custom_call.1} parent=1 // pred_check
      _
    $region7: #{tpu_custom_call.1} parent=1 // pred_check_branch
      %26 = sbr.rel (0) target = $region9
    $region8: #{tpu_custom_call.1} parent=1 // pred_region
      %s28 = ssub.s32 1024, 1024
      %29 = vsyncadd [#allocation6], %s28
      %s30 = sshll.u32 [#allocation5], 4
      %s31 = int_to_ptr.vmem [resolvable:$true] %s30
      %36 = dma.hbm_to_vmem [thread:$0]  %s1, 1024, %s31, [#allocation6], 64, 64, 4
    $region9: #{tpu_custom_call.1} parent=1 // pred_fallthru
      _
    // Predicated region
    $region10: #{tpu_custom_call.1} parent=1 // pred_check
      _
    $region11: #{tpu_custom_call.1} parent=1 // pred_check_branch
      %38 = sbr.rel (0) target = $region13
    $region12: #{tpu_custom_call.1} parent=1 // pred_region
      %39 = dma.done [#allocation3], 1024
    $region13: #{tpu_custom_call.1} parent=1 // pred_fallthru
      _
    // Predicated region
    $region14: #{tpu_custom_call.1} parent=1 // pred_check
      _
    $region15: #{tpu_custom_call.1} parent=1 // pred_check_branch
      %41 = sbr.rel (0) target = $region17
    $region16: #{tpu_custom_call.1} parent=1 // pred_region
      %42 = dma.done [#allocation6], 1024
    $region17: #{tpu_custom_call.1} parent=1 // pred_fallthru
      _
    %v44 = vld [vmem:[#allocation2] sm:$0xf]
    %v45 = vld [vmem:[#allocation2 + $0x4] sm:$0xf]
    %v46 = vld [vmem:[#allocation2 + $0x8] sm:$0xf]
    %v47 = vld [vmem:[#allocation2 + $0xc] sm:$0xf]
    %v48 = vld [vmem:[#allocation2 + $0x10] sm:$0xf]
    %v49 = vld [vmem:[#allocation2 + $0x14] sm:$0xf]
    %v50 = vld [vmem:[#allocation2 + $0x18] sm:$0xf]
    %v51 = vld [vmem:[#allocation2 + $0x1c] sm:$0xf]
    %v52 = vld [vmem:[#allocation2 + $0x20] sm:$0xf]
    %v53 = vld [vmem:[#allocation2 + $0x24] sm:$0xf]
    %v54 = vld [vmem:[#allocation2 + $0x28] sm:$0xf]
    %v55 = vld [vmem:[#allocation2 + $0x2c] sm:$0xf]
    %v56 = vld [vmem:[#allocation2 + $0x30] sm:$0xf]
    %v57 = vld [vmem:[#allocation2 + $0x34] sm:$0xf]
    %v58 = vld [vmem:[#allocation2 + $0x38] sm:$0xf]
    %v59 = vld [vmem:[#allocation2 + $0x3c] sm:$0xf]
    %v60 = vld [vmem:[#allocation5] sm:$0xf]
    %v61 = vld [vmem:[#allocation5 + $0x4] sm:$0xf]
    %v62 = vld [vmem:[#allocation5 + $0x8] sm:$0xf]
    %v63 = vld [vmem:[#allocation5 + $0xc] sm:$0xf]
    %v64 = vld [vmem:[#allocation5 + $0x10] sm:$0xf]
    %v65 = vld [vmem:[#allocation5 + $0x14] sm:$0xf]
    %v66 = vld [vmem:[#allocation5 + $0x18] sm:$0xf]
    %v67 = vld [vmem:[#allocation5 + $0x1c] sm:$0xf]
    %v68 = vld [vmem:[#allocation5 + $0x20] sm:$0xf]
    %v69 = vld [vmem:[#allocation5 + $0x24] sm:$0xf]
    %v70 = vld [vmem:[#allocation5 + $0x28] sm:$0xf]
    %v71 = vld [vmem:[#allocation5 + $0x2c] sm:$0xf]
    %v72 = vld [vmem:[#allocation5 + $0x30] sm:$0xf]
    %v73 = vld [vmem:[#allocation5 + $0x34] sm:$0xf]
    %v74 = vld [vmem:[#allocation5 + $0x38] sm:$0xf]
    %v75 = vld [vmem:[#allocation5 + $0x3c] sm:$0xf]
    %v92 = vunpack.c.l.b16 %v44
    %v93 = vunpack.c.l.b16 %v45
    %v94 = vunpack.c.l.b16 %v46
    %v95 = vunpack.c.l.b16 %v47
    %v96 = vunpack.c.l.b16 %v48
    %v97 = vunpack.c.l.b16 %v49
    %v98 = vunpack.c.l.b16 %v50
    %v99 = vunpack.c.l.b16 %v51
    %v100 = vunpack.c.l.b16 %v52
    %v101 = vunpack.c.l.b16 %v53
    %v102 = vunpack.c.l.b16 %v54
    %v103 = vunpack.c.l.b16 %v55
    %v104 = vunpack.c.l.b16 %v56
    %v105 = vunpack.c.l.b16 %v57
    %v106 = vunpack.c.l.b16 %v58
    %v107 = vunpack.c.l.b16 %v59
    %v108 = vpack.c.b16 %v93, %v92
    %v109 = vpack.c.b16 %v95, %v94
    %v110 = vpack.c.b16 %v97, %v96
    %v111 = vpack.c.b16 %v99, %v98
    %v112 = vpack.c.b16 %v101, %v100
    %v113 = vpack.c.b16 %v103, %v102
    %v114 = vpack.c.b16 %v105, %v104
    %v115 = vpack.c.b16 %v107, %v106
    %v140 = vunpack.c.l.b16 %v60
    %v141 = vunpack.c.l.b16 %v61
    %v142 = vunpack.c.l.b16 %v62
    %v143 = vunpack.c.l.b16 %v63
    %v144 = vunpack.c.l.b16 %v64
    %v145 = vunpack.c.l.b16 %v65
    %v146 = vunpack.c.l.b16 %v66
    %v147 = vunpack.c.l.b16 %v67
    %v148 = vunpack.c.l.b16 %v68
    %v149 = vunpack.c.l.b16 %v69
    %v150 = vunpack.c.l.b16 %v70
    %v151 = vunpack.c.l.b16 %v71
    %v152 = vunpack.c.l.b16 %v72
    %v153 = vunpack.c.l.b16 %v73
    %v154 = vunpack.c.l.b16 %v74
    %v155 = vunpack.c.l.b16 %v75
    %v156 = vpack.c.b16 %v141, %v140
    %v157 = vpack.c.b16 %v143, %v142
    %v158 = vpack.c.b16 %v145, %v144
    %v159 = vpack.c.b16 %v147, %v146
    %v160 = vpack.c.b16 %v149, %v148
    %v161 = vpack.c.b16 %v151, %v150
    %v162 = vpack.c.b16 %v153, %v152
    %v163 = vpack.c.b16 %v155, %v154
    %172 = vmatprep.subr.bf16.mxu0 0
    %173 = vmatpush1.bf16.msra.mxu0 %v156
    %174 = vmatprep.subr.bf16.mxu0 0
    %175 = vmatpush1.bf16.msra.mxu0 %v157
    %176 = vmatprep.subr.bf16.mxu0 0
    %177 = vmatpush1.bf16.msra.mxu0 %v158
    %178 = vmatprep.subr.bf16.mxu0 0
    %179 = vmatpush1.bf16.msra.mxu0 %v159
    %180 = vmatprep.subr.bf16.mxu0 0
    %181 = vmatpush1.bf16.msra.mxu0 %v160
    %182 = vmatprep.subr.bf16.mxu0 0
    %183 = vmatpush1.bf16.msra.mxu0 %v161
    %184 = vmatprep.subr.bf16.mxu0 0
    %185 = vmatpush1.bf16.msra.mxu0 %v162
    %186 = vmatprep.subr.bf16.mxu0 0
    %187 = vmatpush1.bf16.msra.mxu0 %v163
    %188 = vmatprep.subr.bf16.mxu0 0
    %189 = vmatpush1.bf16.msra.mxu0 0
    %190 = vmatprep.subr.bf16.mxu0 0
    %191 = vmatpush1.bf16.msra.mxu0 0
    %192 = vmatprep.subr.bf16.mxu0 0
    %193 = vmatpush1.bf16.msra.mxu0 0
    %194 = vmatprep.subr.bf16.mxu0 0
    %195 = vmatpush1.bf16.msra.mxu0 0
    %196 = vmatprep.subr.bf16.mxu0 0
    %197 = vmatpush1.bf16.msra.mxu0 0
    %198 = vmatprep.subr.bf16.mxu0 0
    %199 = vmatpush1.bf16.msra.mxu0 0
    %200 = vmatprep.subr.bf16.mxu0 0
    %201 = vmatpush1.bf16.msra.mxu0 0
    %202 = vmatprep.subr.bf16.mxu0 0
    %203 = vmatpush1.bf16.msra.mxu0 0
    %204 = vmatprep.mubr.bf16.mxu0 0
    %205 = vmatmul.mubr.bf16.gmra.mrb[0].mxu0 %v108
    %v206 = vpop.f32.mrb[0].mxu0
    %v207 = vadd.f32 0.0, %v206
    %v208 = vpop.f32.mrb[0].mxu0
    %v209 = vpop.f32.mrb[0].mxu0
    %v210 = vadd.f32 0.0, %v209
    %v211 = vpop.f32.mrb[0].mxu0
    %212 = vmatprep.mubr.bf16.mxu0 0
    %213 = vmatmul.mubr.bf16.gmra.mrb[0].mxu0 %v109
    %v214 = vpop.f32.mrb[0].mxu0
    %v215 = vadd.f32 0.0, %v214
    %v216 = vpop.f32.mrb[0].mxu0
    %v217 = vpop.f32.mrb[0].mxu0
    %v218 = vadd.f32 0.0, %v217
    %v219 = vpop.f32.mrb[0].mxu0
    %220 = vmatprep.mubr.bf16.mxu0 0
    %221 = vmatmul.mubr.bf16.gmra.mrb[0].mxu0 %v110
    %v222 = vpop.f32.mrb[0].mxu0
    %v223 = vadd.f32 0.0, %v222
    %v224 = vpop.f32.mrb[0].mxu0
    %v225 = vpop.f32.mrb[0].mxu0
    %v226 = vadd.f32 0.0, %v225
    %v227 = vpop.f32.mrb[0].mxu0
    %228 = vmatprep.mubr.bf16.mxu0 0
    %229 = vmatmul.mubr.bf16.gmra.mrb[0].mxu0 %v111
    %v230 = vpop.f32.mrb[0].mxu0
    %v231 = vadd.f32 0.0, %v230
    %v232 = vpop.f32.mrb[0].mxu0
    %v233 = vpop.f32.mrb[0].mxu0
    %v234 = vadd.f32 0.0, %v233
    %v235 = vpop.f32.mrb[0].mxu0
    %236 = vmatprep.mubr.bf16.mxu0 0
    %237 = vmatmul.mubr.bf16.gmra.mrb[0].mxu0 %v112
    %v238 = vpop.f32.mrb[0].mxu0
    %v239 = vadd.f32 0.0, %v238
    %v240 = vpop.f32.mrb[0].mxu0
    %v241 = vpop.f32.mrb[0].mxu0
    %v242 = vadd.f32 0.0, %v241
    %v243 = vpop.f32.mrb[0].mxu0
    %244 = vmatprep.mubr.bf16.mxu0 0
    %245 = vmatmul.mubr.bf16.gmra.mrb[0].mxu0 %v113
    %v246 = vpop.f32.mrb[0].mxu0
    %v247 = vadd.f32 0.0, %v246
    %v248 = vpop.f32.mrb[0].mxu0
    %v249 = vpop.f32.mrb[0].mxu0
    %v250 = vadd.f32 0.0, %v249
    %v251 = vpop.f32.mrb[0].mxu0
    %252 = vmatprep.mubr.bf16.mxu0 0
    %253 = vmatmul.mubr.bf16.gmra.mrb[0].mxu0 %v114
    %v254 = vpop.f32.mrb[0].mxu0
    %v255 = vadd.f32 0.0, %v254
    %v256 = vpop.f32.mrb[0].mxu0
    %v257 = vpop.f32.mrb[0].mxu0
    %v258 = vadd.f32 0.0, %v257
    %v259 = vpop.f32.mrb[0].mxu0
    %260 = vmatprep.mubr.bf16.mxu0 0
    %261 = vmatmul.mubr.bf16.gmra.mrb[0].mxu0 %v115
    %v262 = vpop.f32.mrb[0].mxu0
    %v263 = vadd.f32 0.0, %v262
    %v264 = vpop.f32.mrb[0].mxu0
    %v265 = vpop.f32.mrb[0].mxu0
    %v266 = vadd.f32 0.0, %v265
    %v267 = vpop.f32.mrb[0].mxu0
    %268 = vdwg.mxu0
    %v269 = vpack.c.bf16 %v210, %v207
    %v270 = vpack.c.bf16 %v218, %v215
    %v271 = vpack.c.bf16 %v226, %v223
    %v272 = vpack.c.bf16 %v234, %v231
    %v273 = vpack.c.bf16 %v242, %v239
    %v274 = vpack.c.bf16 %v250, %v247
    %v275 = vpack.c.bf16 %v258, %v255
    %v276 = vpack.c.bf16 %v266, %v263
    %v285 = vunpack.c.l.b16 %v269
    %v286 = vunpack.c.h.b16 %v269
    %v287 = vunpack.c.l.b16 %v270
    %v288 = vunpack.c.h.b16 %v270
    %v289 = vunpack.c.l.b16 %v271
    %v290 = vunpack.c.h.b16 %v271
    %v291 = vunpack.c.l.b16 %v272
    %v292 = vunpack.c.h.b16 %v272
    %v293 = vunpack.c.l.b16 %v273
    %v294 = vunpack.c.h.b16 %v273
    %v295 = vunpack.c.l.b16 %v274
    %v296 = vunpack.c.h.b16 %v274
    %v297 = vunpack.c.l.b16 %v275
    %v298 = vunpack.c.h.b16 %v275
    %v299 = vunpack.c.l.b16 %v276
    %v300 = vunpack.c.h.b16 %v276
    %v301 = vpack.c.b16 %v285, %v285
    %v302 = vpack.c.b16 %v286, %v286
    %v303 = vpack.c.b16 %v287, %v287
    %v304 = vpack.c.b16 %v288, %v288
    %v305 = vpack.c.b16 %v289, %v289
    %v306 = vpack.c.b16 %v290, %v290
    %v307 = vpack.c.b16 %v291, %v291
    %v308 = vpack.c.b16 %v292, %v292
    %v309 = vpack.c.b16 %v293, %v293
    %v310 = vpack.c.b16 %v294, %v294
    %v311 = vpack.c.b16 %v295, %v295
    %v312 = vpack.c.b16 %v296, %v296
    %v313 = vpack.c.b16 %v297, %v297
    %v314 = vpack.c.b16 %v298, %v298
    %v315 = vpack.c.b16 %v299, %v299
    %v316 = vpack.c.b16 %v300, %v300
    %333 = vst [vmem:[#allocation7] sm:$0xf] %v301
    %334 = vst [vmem:[#allocation7 + $0x4] sm:$0xf] %v302
    %335 = vst [vmem:[#allocation7 + $0x8] sm:$0xf] %v303
    %336 = vst [vmem:[#allocation7 + $0xc] sm:$0xf] %v304
    %337 = vst [vmem:[#allocation7 + $0x10] sm:$0xf] %v305
    %338 = vst [vmem:[#allocation7 + $0x14] sm:$0xf] %v306
    %339 = vst [vmem:[#allocation7 + $0x18] sm:$0xf] %v307
    %340 = vst [vmem:[#allocation7 + $0x1c] sm:$0xf] %v308
    %341 = vst [vmem:[#allocation7 + $0x20] sm:$0xf] %v309
    %342 = vst [vmem:[#allocation7 + $0x24] sm:$0xf] %v310
    %343 = vst [vmem:[#allocation7 + $0x28] sm:$0xf] %v311
    %344 = vst [vmem:[#allocation7 + $0x2c] sm:$0xf] %v312
    %345 = vst [vmem:[#allocation7 + $0x30] sm:$0xf] %v313
    %346 = vst [vmem:[#allocation7 + $0x34] sm:$0xf] %v314
    %347 = vst [vmem:[#allocation7 + $0x38] sm:$0xf] %v315
    %348 = vst [vmem:[#allocation7 + $0x3c] sm:$0xf] %v316
    %v349 = vadd.f32 %v207, %v210
    %v350 = vadd.f32 %v349, %v215
    %v351 = vadd.f32 %v350, %v218
    %v352 = vadd.f32 %v351, %v223
    %v353 = vadd.f32 %v352, %v226
    %v354 = vadd.f32 %v353, %v231
    %v355 = vadd.f32 %v354, %v234
    %v356 = vadd.f32 %v355, %v239
    %v357 = vadd.f32 %v356, %v242
    %v358 = vadd.f32 %v357, %v247
    %v359 = vadd.f32 %v358, %v250
    %v360 = vadd.f32 %v359, %v255
    %v361 = vadd.f32 %v360, %v258
    %v362 = vadd.f32 %v361, %v263
    %v363 = vadd.f32 %v362, %v266
    %v364 = vrot.slane %v363, 4
    %v365 = vadd.f32 %v363, %v364
    %v366 = vrot.slane %v365, 2
    %v367 = vadd.f32 %v365, %v366
    %v368 = vrot.slane %v367, 1
    %v369 = vadd.f32 %v367, %v368
    %v370 = vmul.f32 %v207, %v207
    %v371 = vmul.f32 %v210, %v210
    %v372 = vmul.f32 %v215, %v215
    %v373 = vmul.f32 %v218, %v218
    %v374 = vmul.f32 %v223, %v223
    %v375 = vmul.f32 %v226, %v226
    %v376 = vmul.f32 %v231, %v231
    %v377 = vmul.f32 %v234, %v234
    %v378 = vmul.f32 %v239, %v239
    %v379 = vmul.f32 %v242, %v242
    %v380 = vmul.f32 %v247, %v247
    %v381 = vmul.f32 %v250, %v250
    %v382 = vmul.f32 %v255, %v255
    %v383 = vmul.f32 %v258, %v258
    %v384 = vmul.f32 %v263, %v263
    %v385 = vmul.f32 %v266, %v266
    %v386 = vadd.f32 %v370, %v371
    %v387 = vadd.f32 %v386, %v372
    %v388 = vadd.f32 %v387, %v373
    %v389 = vadd.f32 %v388, %v374
    %v390 = vadd.f32 %v389, %v375
    %v391 = vadd.f32 %v390, %v376
    %v392 = vadd.f32 %v391, %v377
    %v393 = vadd.f32 %v392, %v378
    %v394 = vadd.f32 %v393, %v379
    %v395 = vadd.f32 %v394, %v380
    %v396 = vadd.f32 %v395, %v381
    %v397 = vadd.f32 %v396, %v382
    %v398 = vadd.f32 %v397, %v383
    %v399 = vadd.f32 %v398, %v384
    %v400 = vadd.f32 %v399, %v385
    %v401 = vrot.slane %v400, 4
    %v402 = vadd.f32 %v400, %v401
    %v403 = vrot.slane %v402, 2
    %v404 = vadd.f32 %v402, %v403
    %v405 = vrot.slane %v404, 1
    %v406 = vadd.f32 %v404, %v405
    %vm407 = vcmask 1040384
    %v408 = vsel %vm407, %v369, %v406
    %409 = vst [vmem:[#allocation8] sm:$0x3] %v408
    // Predicated region
    $region18: #{tpu_custom_call.1} parent=1 // pred_check
      _
    $region19: #{tpu_custom_call.1} parent=1 // pred_check_branch
      %411 = sbr.rel (0) target = $region21
    $region20: #{tpu_custom_call.1} parent=1 // pred_region
      %s413 = ssub.s32 1024, 1024
      %414 = vsyncadd [#allocation4], %s413
      %s415 = sshll.u32 [#allocation7], 4
      %s416 = int_to_ptr.vmem [resolvable:$true] %s415
      %421 = dma.vmem_to_hbm [thread:$0]  %s416, 1024, %s2, [#allocation4], 64, 64, 4
    $region21: #{tpu_custom_call.1} parent=1 // pred_fallthru
      _
    // Predicated region
    $region22: #{tpu_custom_call.1} parent=1 // pred_check
      _
    $region23: #{tpu_custom_call.1} parent=1 // pred_check_branch
      %423 = sbr.rel (0) target = $region25
    $region24: #{tpu_custom_call.1} parent=1 // pred_region
      %s425 = ssub.s32 32, 32
      %426 = vsyncadd [#allocation9], %s425
      %s428 = sshll.u32 [#allocation8], 4
      %s429 = int_to_ptr.vmem [resolvable:$true] %s428
      %431 = dma.vmem_to_hbm [thread:$0]  %s429, 32, %s3, [#allocation9]
    $region25: #{tpu_custom_call.1} parent=1 // pred_fallthru
      _
    // Predicated region
    $region26: #{tpu_custom_call.1} parent=1 // pred_check
      _
    $region27: #{tpu_custom_call.1} parent=1 // pred_check_branch
      %433 = sbr.rel (0) target = $region29
    $region28: #{tpu_custom_call.1} parent=1 // pred_region
      %434 = dma.done [#allocation4], 1024
    $region29: #{tpu_custom_call.1} parent=1 // pred_fallthru
      _
    // Predicated region
    $region30: #{tpu_custom_call.1} parent=1 // pred_check
      _
    $region31: #{tpu_custom_call.1} parent=1 // pred_check_branch
      %436 = sbr.rel (0) target = $region33
    $region32: #{tpu_custom_call.1} parent=1 // pred_region
      %437 = dma.done [#allocation9], 32
    $region33: #{tpu_custom_call.1} parent=1 // pred_fallthru
      _
    %438 = vsyncpa [#allocation3], 1
    %439 = vsyncpa [#allocation6], 1
    %440 = vsyncpa [#allocation4], 1
    %441 = vsyncpa [#allocation9], 1

</llo_original>
